<compile_context>
chip_gen: v6e
topology: v6e:2x2x1
jax: 0.10.0
libtpu: 0.0.40
codegen_flags: <defaults>
</compile_context>

<pallas_src>
import jax
import jax.numpy as jnp
from jax.experimental import pallas as pl
from jax.experimental.pallas import tpu as pltpu


def _round_up(n, m):
    return ((n + m - 1) // m) * m


def _mlp_kernel(x_ref, w1_ref, b1_ref, w2_ref, b2_ref, o_ref):
    # x_ref:  (8, TB)   w1_ref: (16, 8)  b1_ref: (16, 1)
    # w2_ref: (1, 16)   b2_ref: (1, 1)   o_ref:  (1, TB)
    tb = o_ref.shape[-1]
    f_in = w1_ref.shape[1]     # 8
    hidden = w2_ref.shape[1]   # 16

    x = x_ref[...]             # (8, TB)  batch on the lane axis
    w1 = w1_ref[...]           # (16, 8)
    w2 = w2_ref[...]           # (1, 16)

    # fc1: h = W1 @ x + b1.  K=8 contraction unrolled as VPU broadcast FMAs;
    # bias folded into the accumulator init (single hoisted broadcast).
    h = jnp.broadcast_to(b1_ref[...], (hidden, tb))
    for k in range(f_in):
        h = h + w1[:, k:k + 1] * x[k:k + 1, :]
    h = jnp.maximum(h, 0.0)    # ReLU

    # fc3: y = W2 @ h + b2.  K=16 contraction unrolled the same way.
    y = jnp.broadcast_to(b2_ref[...], (1, tb))
    for k in range(hidden):
        y = y + w2[:, k:k + 1] * h[k:k + 1, :]

    o_ref[...] = y.astype(o_ref.dtype)


def net_forward(x, w1, b1, w2, b2, *, tile_batch=1024):
    """Forward pass of Net.

    x:  (B, 8)  float32  (PyTorch row-major, features last)
    w1: (16, 8) float32  (fc1.weight, PyTorch (out, in) layout)
    b1: (16,)   float32  (fc1.bias)
    w2: (1, 16) float32  (fc3.weight)
    b2: (1,)    float32  (fc3.bias)
    returns (B, 1) float32
    """
    B, f_in = x.shape
    hidden = w1.shape[0]

    # Batch goes on the 128-lane axis: one transpose in the wrapper, not per step.
    x_t = x.T                                            # (8, B)

    # 128-aligned batch tile; pad B up to a whole number of tiles.
    tb = _round_up(min(int(tile_batch), max(B, 1)), 128)
    B_pad = _round_up(B, tb)
    if B_pad != B:
        x_t = jnp.pad(x_t, ((0, 0), (0, B_pad - B)))

    b1_c = b1.reshape(hidden, 1)
    b2_c = b2.reshape(1, 1)

    out = pl.pallas_call(
        _mlp_kernel,
        out_shape=jax.ShapeDtypeStruct((1, B_pad), jnp.float32),
        grid_spec=pltpu.PrefetchScalarGridSpec(
            num_scalar_prefetch=0,
            grid=(B_pad // tb,),
            in_specs=[
                pl.BlockSpec((f_in, tb), lambda i: (0, i)),      # x tile, streamed
                pl.BlockSpec((hidden, f_in), lambda i: (0, 0)),  # w1, VMEM-resident
                pl.BlockSpec((hidden, 1), lambda i: (0, 0)),     # b1
                pl.BlockSpec((1, hidden), lambda i: (0, 0)),     # w2
                pl.BlockSpec((1, 1), lambda i: (0, 0)),          # b2
            ],
            out_specs=pl.BlockSpec((1, tb), lambda i: (0, i)),   # lane-dense output
        ),
        compiler_params=pltpu.CompilerParams(
            # Batch tiles are independent -> shard across TCs on v7x.
            dimension_semantics=("parallel",),
        ),
    )(x_t, w1, b1_c, w2, b2_c)

    # Strip batch padding and return in PyTorch (B, 1) layout.
    return out[:, :B].T


def init_params(key):
    """PyTorch-layout params: fc1.weight (16, 8), fc1.bias (16,),
    fc3.weight (1, 16), fc3.bias (1,), with nn.Linear's default
    Uniform(-1/sqrt(fan_in), 1/sqrt(fan_in)) init."""
    k1, k2, k3, k4 = jax.random.split(key, 4)
    bound1 = 1.0 / jnp.sqrt(8.0)
    bound2 = 1.0 / jnp.sqrt(16.0)
    w1 = jax.random.uniform(k1, (16, 8), jnp.float32, -bound1, bound1)
    b1 = jax.random.uniform(k2, (16,), jnp.float32, -bound1, bound1)
    w2 = jax.random.uniform(k3, (1, 16), jnp.float32, -bound2, bound2)
    b2 = jax.random.uniform(k4, (1,), jnp.float32, -bound2, bound2)
    return w1, b1, w2, b2


if __name__ == "__main__":
    key = jax.random.PRNGKey(0)
    kx, kp = jax.random.split(key)

    B = 300  # small; not a multiple of 128 -> exercises the padded tail
    x = jax.random.normal(kx, (B, 8), jnp.float32)
    w1, b1, w2, b2 = init_params(kp)

    # Small tile so the test also exercises a multi-step, pipelined grid.
    out = net_forward(x, w1, b1, w2, b2, tile_batch=128)
    out = jax.block_until_ready(out)

    # Reference in plain JAX (PyTorch Linear semantics: y = x @ W.T + b).
    ref = jnp.maximum(x @ w1.T + b1, 0.0) @ w2.T + b2
    assert out.shape == (B, 1)
    assert jnp.allclose(out, ref, atol=1e-5, rtol=1e-5)

    print("KERNEL_OK")
</pallas_src>

<mosaic_0001>
module attributes {stable_mosaic.version = 11 : i64} {
  func.func @_mlp_kernel(%arg0: i32, %arg1: memref<8x128xf32, #tpu.memory_space<vmem>>, %arg2: memref<16x8xf32, #tpu.memory_space<vmem>>, %arg3: memref<16x1xf32, #tpu.memory_space<vmem>>, %arg4: memref<1x16xf32, #tpu.memory_space<vmem>>, %arg5: memref<1x1xf32, #tpu.memory_space<vmem>>, %arg6: memref<1x128xf32, #tpu.memory_space<vmem>>) attributes {dimension_semantics = [#tpu.dimension_semantics<parallel>], iteration_bounds = array<i64: 3>, scalar_prefetch = 0 : i64, scratch_operands = 0 : i64, tpu.core_type = #tpu.core_type<tc>, window_params = [{transform_indices = @transform_0, window_bounds = array<i64: 8, 128>}, {pipeline_mode = #tpu.pipeline_mode<synchronous>, transform_indices = @transform_1, window_bounds = array<i64: 16, 8>}, {pipeline_mode = #tpu.pipeline_mode<synchronous>, transform_indices = @transform_2, window_bounds = array<i64: 16, 1>}, {pipeline_mode = #tpu.pipeline_mode<synchronous>, transform_indices = @transform_3, window_bounds = array<i64: 1, 16>}, {pipeline_mode = #tpu.pipeline_mode<synchronous>, transform_indices = @transform_4, window_bounds = array<i64: 1, 1>}, {transform_indices = @transform_5, window_bounds = array<i64: 1, 128>}]} {
    %c0 = arith.constant 0 : index
    %c0_0 = arith.constant 0 : index
    %0 = vector.load %arg1[%c0, %c0_0] : memref<8x128xf32, #tpu.memory_space<vmem>>, vector<8x128xf32>
    %c0_1 = arith.constant 0 : index
    %c0_2 = arith.constant 0 : index
    %1 = vector.load %arg2[%c0_1, %c0_2] : memref<16x8xf32, #tpu.memory_space<vmem>>, vector<16x8xf32>
    %c0_3 = arith.constant 0 : index
    %c0_4 = arith.constant 0 : index
    %2 = vector.load %arg4[%c0_3, %c0_4] : memref<1x16xf32, #tpu.memory_space<vmem>>, vector<1x16xf32>
    %c0_5 = arith.constant 0 : index
    %c0_6 = arith.constant 0 : index
    %3 = vector.load %arg3[%c0_5, %c0_6] : memref<16x1xf32, #tpu.memory_space<vmem>>, vector<16x1xf32>
    %4 = vector.shape_cast %3 : vector<16x1xf32> to vector<16x1xf32>
    %5 = vector.broadcast %4 : vector<16x1xf32> to vector<16x128xf32>
    %6 = vector.extract_strided_slice %1 {offsets = [0, 0], sizes = [16, 1], strides = [1, 1]} : vector<16x8xf32> to vector<16x1xf32>
    %7 = vector.extract_strided_slice %0 {offsets = [0, 0], sizes = [1, 128], strides = [1, 1]} : vector<8x128xf32> to vector<1x128xf32>
    %8 = vector.broadcast %6 : vector<16x1xf32> to vector<16x128xf32>
    %9 = vector.broadcast %7 : vector<1x128xf32> to vector<16x128xf32>
    %10 = arith.mulf %8, %9 : vector<16x128xf32>
    %11 = arith.addf %5, %10 : vector<16x128xf32>
    %12 = vector.extract_strided_slice %1 {offsets = [0, 1], sizes = [16, 1], strides = [1, 1]} : vector<16x8xf32> to vector<16x1xf32>
    %13 = vector.extract_strided_slice %0 {offsets = [1, 0], sizes = [1, 128], strides = [1, 1]} : vector<8x128xf32> to vector<1x128xf32>
    %14 = vector.broadcast %12 : vector<16x1xf32> to vector<16x128xf32>
    %15 = vector.broadcast %13 : vector<1x128xf32> to vector<16x128xf32>
    %16 = arith.mulf %14, %15 : vector<16x128xf32>
    %17 = arith.addf %11, %16 : vector<16x128xf32>
    %18 = vector.extract_strided_slice %1 {offsets = [0, 2], sizes = [16, 1], strides = [1, 1]} : vector<16x8xf32> to vector<16x1xf32>
    %19 = vector.extract_strided_slice %0 {offsets = [2, 0], sizes = [1, 128], strides = [1, 1]} : vector<8x128xf32> to vector<1x128xf32>
    %20 = vector.broadcast %18 : vector<16x1xf32> to vector<16x128xf32>
    %21 = vector.broadcast %19 : vector<1x128xf32> to vector<16x128xf32>
    %22 = arith.mulf %20, %21 : vector<16x128xf32>
    %23 = arith.addf %17, %22 : vector<16x128xf32>
    %24 = vector.extract_strided_slice %1 {offsets = [0, 3], sizes = [16, 1], strides = [1, 1]} : vector<16x8xf32> to vector<16x1xf32>
    %25 = vector.extract_strided_slice %0 {offsets = [3, 0], sizes = [1, 128], strides = [1, 1]} : vector<8x128xf32> to vector<1x128xf32>
    %26 = vector.broadcast %24 : vector<16x1xf32> to vector<16x128xf32>
    %27 = vector.broadcast %25 : vector<1x128xf32> to vector<16x128xf32>
    %28 = arith.mulf %26, %27 : vector<16x128xf32>
    %29 = arith.addf %23, %28 : vector<16x128xf32>
    %30 = vector.extract_strided_slice %1 {offsets = [0, 4], sizes = [16, 1], strides = [1, 1]} : vector<16x8xf32> to vector<16x1xf32>
    %31 = vector.extract_strided_slice %0 {offsets = [4, 0], sizes = [1, 128], strides = [1, 1]} : vector<8x128xf32> to vector<1x128xf32>
    %32 = vector.broadcast %30 : vector<16x1xf32> to vector<16x128xf32>
    %33 = vector.broadcast %31 : vector<1x128xf32> to vector<16x128xf32>
    %34 = arith.mulf %32, %33 : vector<16x128xf32>
    %35 = arith.addf %29, %34 : vector<16x128xf32>
    %36 = vector.extract_strided_slice %1 {offsets = [0, 5], sizes = [16, 1], strides = [1, 1]} : vector<16x8xf32> to vector<16x1xf32>
    %37 = vector.extract_strided_slice %0 {offsets = [5, 0], sizes = [1, 128], strides = [1, 1]} : vector<8x128xf32> to vector<1x128xf32>
    %38 = vector.broadcast %36 : vector<16x1xf32> to vector<16x128xf32>
    %39 = vector.broadcast %37 : vector<1x128xf32> to vector<16x128xf32>
    %40 = arith.mulf %38, %39 : vector<16x128xf32>
    %41 = arith.addf %35, %40 : vector<16x128xf32>
    %42 = vector.extract_strided_slice %1 {offsets = [0, 6], sizes = [16, 1], strides = [1, 1]} : vector<16x8xf32> to vector<16x1xf32>
    %43 = vector.extract_strided_slice %0 {offsets = [6, 0], sizes = [1, 128], strides = [1, 1]} : vector<8x128xf32> to vector<1x128xf32>
    %44 = vector.broadcast %42 : vector<16x1xf32> to vector<16x128xf32>
    %45 = vector.broadcast %43 : vector<1x128xf32> to vector<16x128xf32>
    %46 = arith.mulf %44, %45 : vector<16x128xf32>
    %47 = arith.addf %41, %46 : vector<16x128xf32>
    %48 = vector.extract_strided_slice %1 {offsets = [0, 7], sizes = [16, 1], strides = [1, 1]} : vector<16x8xf32> to vector<16x1xf32>
    %49 = vector.extract_strided_slice %0 {offsets = [7, 0], sizes = [1, 128], strides = [1, 1]} : vector<8x128xf32> to vector<1x128xf32>
    %50 = vector.broadcast %48 : vector<16x1xf32> to vector<16x128xf32>
    %51 = vector.broadcast %49 : vector<1x128xf32> to vector<16x128xf32>
    %52 = arith.mulf %50, %51 : vector<16x128xf32>
    %53 = arith.addf %47, %52 : vector<16x128xf32>
    %cst = arith.constant 0.000000e+00 : f32
    %54 = vector.broadcast %cst : f32 to vector<16x128xf32>
    %55 = arith.maximumf %53, %54 : vector<16x128xf32>
    %c0_7 = arith.constant 0 : index
    %c0_8 = arith.constant 0 : index
    %56 = vector.load %arg5[%c0_7, %c0_8] : memref<1x1xf32, #tpu.memory_space<vmem>>, vector<1x1xf32>
    %57 = vector.shape_cast %56 : vector<1x1xf32> to vector<1x1xf32>
    %58 = vector.broadcast %57 : vector<1x1xf32> to vector<1x128xf32>
    %59 = vector.extract_strided_slice %2 {offsets = [0, 0], sizes = [1, 1], strides = [1, 1]} : vector<1x16xf32> to vector<1x1xf32>
    %60 = vector.extract_strided_slice %55 {offsets = [0, 0], sizes = [1, 128], strides = [1, 1]} : vector<16x128xf32> to vector<1x128xf32>
    %61 = vector.broadcast %59 : vector<1x1xf32> to vector<1x128xf32>
    %62 = arith.mulf %61, %60 : vector<1x128xf32>
    %63 = arith.addf %58, %62 : vector<1x128xf32>
    %64 = vector.extract_strided_slice %2 {offsets = [0, 1], sizes = [1, 1], strides = [1, 1]} : vector<1x16xf32> to vector<1x1xf32>
    %65 = vector.extract_strided_slice %55 {offsets = [1, 0], sizes = [1, 128], strides = [1, 1]} : vector<16x128xf32> to vector<1x128xf32>
    %66 = vector.broadcast %64 : vector<1x1xf32> to vector<1x128xf32>
    %67 = arith.mulf %66, %65 : vector<1x128xf32>
    %68 = arith.addf %63, %67 : vector<1x128xf32>
    %69 = vector.extract_strided_slice %2 {offsets = [0, 2], sizes = [1, 1], strides = [1, 1]} : vector<1x16xf32> to vector<1x1xf32>
    %70 = vector.extract_strided_slice %55 {offsets = [2, 0], sizes = [1, 128], strides = [1, 1]} : vector<16x128xf32> to vector<1x128xf32>
    %71 = vector.broadcast %69 : vector<1x1xf32> to vector<1x128xf32>
    %72 = arith.mulf %71, %70 : vector<1x128xf32>
    %73 = arith.addf %68, %72 : vector<1x128xf32>
    %74 = vector.extract_strided_slice %2 {offsets = [0, 3], sizes = [1, 1], strides = [1, 1]} : vector<1x16xf32> to vector<1x1xf32>
    %75 = vector.extract_strided_slice %55 {offsets = [3, 0], sizes = [1, 128], strides = [1, 1]} : vector<16x128xf32> to vector<1x128xf32>
    %76 = vector.broadcast %74 : vector<1x1xf32> to vector<1x128xf32>
    %77 = arith.mulf %76, %75 : vector<1x128xf32>
    %78 = arith.addf %73, %77 : vector<1x128xf32>
    %79 = vector.extract_strided_slice %2 {offsets = [0, 4], sizes = [1, 1], strides = [1, 1]} : vector<1x16xf32> to vector<1x1xf32>
    %80 = vector.extract_strided_slice %55 {offsets = [4, 0], sizes = [1, 128], strides = [1, 1]} : vector<16x128xf32> to vector<1x128xf32>
    %81 = vector.broadcast %79 : vector<1x1xf32> to vector<1x128xf32>
    %82 = arith.mulf %81, %80 : vector<1x128xf32>
    %83 = arith.addf %78, %82 : vector<1x128xf32>
    %84 = vector.extract_strided_slice %2 {offsets = [0, 5], sizes = [1, 1], strides = [1, 1]} : vector<1x16xf32> to vector<1x1xf32>
    %85 = vector.extract_strided_slice %55 {offsets = [5, 0], sizes = [1, 128], strides = [1, 1]} : vector<16x128xf32> to vector<1x128xf32>
    %86 = vector.broadcast %84 : vector<1x1xf32> to vector<1x128xf32>
    %87 = arith.mulf %86, %85 : vector<1x128xf32>
    %88 = arith.addf %83, %87 : vector<1x128xf32>
    %89 = vector.extract_strided_slice %2 {offsets = [0, 6], sizes = [1, 1], strides = [1, 1]} : vector<1x16xf32> to vector<1x1xf32>
    %90 = vector.extract_strided_slice %55 {offsets = [6, 0], sizes = [1, 128], strides = [1, 1]} : vector<16x128xf32> to vector<1x128xf32>
    %91 = vector.broadcast %89 : vector<1x1xf32> to vector<1x128xf32>
    %92 = arith.mulf %91, %90 : vector<1x128xf32>
    %93 = arith.addf %88, %92 : vector<1x128xf32>
    %94 = vector.extract_strided_slice %2 {offsets = [0, 7], sizes = [1, 1], strides = [1, 1]} : vector<1x16xf32> to vector<1x1xf32>
    %95 = vector.extract_strided_slice %55 {offsets = [7, 0], sizes = [1, 128], strides = [1, 1]} : vector<16x128xf32> to vector<1x128xf32>
    %96 = vector.broadcast %94 : vector<1x1xf32> to vector<1x128xf32>
    %97 = arith.mulf %96, %95 : vector<1x128xf32>
    %98 = arith.addf %93, %97 : vector<1x128xf32>
    %99 = vector.extract_strided_slice %2 {offsets = [0, 8], sizes = [1, 1], strides = [1, 1]} : vector<1x16xf32> to vector<1x1xf32>
    %100 = vector.extract_strided_slice %55 {offsets = [8, 0], sizes = [1, 128], strides = [1, 1]} : vector<16x128xf32> to vector<1x128xf32>
    %101 = vector.broadcast %99 : vector<1x1xf32> to vector<1x128xf32>
    %102 = arith.mulf %101, %100 : vector<1x128xf32>
    %103 = arith.addf %98, %102 : vector<1x128xf32>
    %104 = vector.extract_strided_slice %2 {offsets = [0, 9], sizes = [1, 1], strides = [1, 1]} : vector<1x16xf32> to vector<1x1xf32>
    %105 = vector.extract_strided_slice %55 {offsets = [9, 0], sizes = [1, 128], strides = [1, 1]} : vector<16x128xf32> to vector<1x128xf32>
    %106 = vector.broadcast %104 : vector<1x1xf32> to vector<1x128xf32>
    %107 = arith.mulf %106, %105 : vector<1x128xf32>
    %108 = arith.addf %103, %107 : vector<1x128xf32>
    %109 = vector.extract_strided_slice %2 {offsets = [0, 10], sizes = [1, 1], strides = [1, 1]} : vector<1x16xf32> to vector<1x1xf32>
    %110 = vector.extract_strided_slice %55 {offsets = [10, 0], sizes = [1, 128], strides = [1, 1]} : vector<16x128xf32> to vector<1x128xf32>
    %111 = vector.broadcast %109 : vector<1x1xf32> to vector<1x128xf32>
    %112 = arith.mulf %111, %110 : vector<1x128xf32>
    %113 = arith.addf %108, %112 : vector<1x128xf32>
    %114 = vector.extract_strided_slice %2 {offsets = [0, 11], sizes = [1, 1], strides = [1, 1]} : vector<1x16xf32> to vector<1x1xf32>
    %115 = vector.extract_strided_slice %55 {offsets = [11, 0], sizes = [1, 128], strides = [1, 1]} : vector<16x128xf32> to vector<1x128xf32>
    %116 = vector.broadcast %114 : vector<1x1xf32> to vector<1x128xf32>
    %117 = arith.mulf %116, %115 : vector<1x128xf32>
    %118 = arith.addf %113, %117 : vector<1x128xf32>
    %119 = vector.extract_strided_slice %2 {offsets = [0, 12], sizes = [1, 1], strides = [1, 1]} : vector<1x16xf32> to vector<1x1xf32>
    %120 = vector.extract_strided_slice %55 {offsets = [12, 0], sizes = [1, 128], strides = [1, 1]} : vector<16x128xf32> to vector<1x128xf32>
    %121 = vector.broadcast %119 : vector<1x1xf32> to vector<1x128xf32>
    %122 = arith.mulf %121, %120 : vector<1x128xf32>
    %123 = arith.addf %118, %122 : vector<1x128xf32>
    %124 = vector.extract_strided_slice %2 {offsets = [0, 13], sizes = [1, 1], strides = [1, 1]} : vector<1x16xf32> to vector<1x1xf32>
    %125 = vector.extract_strided_slice %55 {offsets = [13, 0], sizes = [1, 128], strides = [1, 1]} : vector<16x128xf32> to vector<1x128xf32>
    %126 = vector.broadcast %124 : vector<1x1xf32> to vector<1x128xf32>
    %127 = arith.mulf %126, %125 : vector<1x128xf32>
    %128 = arith.addf %123, %127 : vector<1x128xf32>
    %129 = vector.extract_strided_slice %2 {offsets = [0, 14], sizes = [1, 1], strides = [1, 1]} : vector<1x16xf32> to vector<1x1xf32>
    %130 = vector.extract_strided_slice %55 {offsets = [14, 0], sizes = [1, 128], strides = [1, 1]} : vector<16x128xf32> to vector<1x128xf32>
    %131 = vector.broadcast %129 : vector<1x1xf32> to vector<1x128xf32>
    %132 = arith.mulf %131, %130 : vector<1x128xf32>
    %133 = arith.addf %128, %132 : vector<1x128xf32>
    %134 = vector.extract_strided_slice %2 {offsets = [0, 15], sizes = [1, 1], strides = [1, 1]} : vector<1x16xf32> to vector<1x1xf32>
    %135 = vector.extract_strided_slice %55 {offsets = [15, 0], sizes = [1, 128], strides = [1, 1]} : vector<16x128xf32> to vector<1x128xf32>
    %136 = vector.broadcast %134 : vector<1x1xf32> to vector<1x128xf32>
    %137 = arith.mulf %136, %135 : vector<1x128xf32>
    %138 = arith.addf %133, %137 : vector<1x128xf32>
    %c0_9 = arith.constant 0 : index
    %c0_10 = arith.constant 0 : index
    %139 = vector.load %arg6[%c0_9, %c0_10] : memref<1x128xf32, #tpu.memory_space<vmem>>, vector<1x128xf32>
    tpu.vector_store %arg6[%c0_9, %c0_10], %138 {strides = array<i32>} : memref<1x128xf32, #tpu.memory_space<vmem>>, vector<1x128xf32>,
    return
  }
  func.func @transform_0(%arg0: i32) -> (i32, i32) {
    %c0_i32 = arith.constant 0 : i32
    %c0_i32_0 = arith.constant 0 : i32
    return %c0_i32, %arg0 : i32, i32
  }
  func.func @transform_1(%arg0: i32) -> (i32, i32) {
    %c0_i32 = arith.constant 0 : i32
    %c0_i32_0 = arith.constant 0 : i32
    %c0_i32_1 = arith.constant 0 : i32
    return %c0_i32, %c0_i32_0 : i32, i32
  }
  func.func @transform_2(%arg0: i32) -> (i32, i32) {
    %c0_i32 = arith.constant 0 : i32
    %c0_i32_0 = arith.constant 0 : i32
    %c0_i32_1 = arith.constant 0 : i32
    return %c0_i32, %c0_i32_0 : i32, i32
  }
  func.func @transform_3(%arg0: i32) -> (i32, i32) {
    %c0_i32 = arith.constant 0 : i32
    %c0_i32_0 = arith.constant 0 : i32
    %c0_i32_1 = arith.constant 0 : i32
    return %c0_i32, %c0_i32_0 : i32, i32
  }
  func.func @transform_4(%arg0: i32) -> (i32, i32) {
    %c0_i32 = arith.constant 0 : i32
    %c0_i32_0 = arith.constant 0 : i32
    %c0_i32_1 = arith.constant 0 : i32
    return %c0_i32, %c0_i32_0 : i32, i32
  }
  func.func @transform_5(%arg0: i32) -> (i32, i32) {
    %c0_i32 = arith.constant 0 : i32
    %c0_i32_0 = arith.constant 0 : i32
    return %c0_i32, %arg0 : i32, i32
  }
}

</mosaic_0001>

<llo_original>
// kernel: tpu_custom_call.1
$region0: #{tpu_custom_call.1}
  #allocation0 [shape = 'u32[]', space=smem, size = 0x4, offset = 0x4, fixed_abs, tag = 'smem constant byte address 0x4 - core index']
  #allocation1 [shape = 'u32[144,128]{1,0:T(1,128)}', space=vmem, size = 0x12000, scoped, tag = 'internal scratch']
  #allocation2 [shape = 'f32[1,1]{1,0:T(1,128)S(1)}', space=vmem, size = 0x200, scoped, tag = 'scoped memory for tpu_custom_call.1']
  %s0 = inlined_call_operand.vmem [shape: f32[8,384], index: 0, kind: input, shape index: {}]
  %s1 = inlined_call_operand.vmem [shape: f32[16,8], index: 1, kind: input, shape index: {}]
  %s2 = inlined_call_operand.vmem [shape: f32[16,1], index: 2, kind: input, shape index: {}]
  %s3 = inlined_call_operand.vmem [shape: f32[1,16], index: 3, kind: input, shape index: {}]
  %s4 = inlined_call_operand.<no memory space> [shape: f32[1,1], index: 4, kind: input, shape index: {}]
  %s5 = inlined_call_operand.hbm [shape: f32[1,384], index: 5, kind: output, shape index: {}]
  %s6 = sld [smem:[#allocation0]]
  $region53: #{tpu_custom_call.1} parent=0
    _
  %s8 = ssub.s32 1, %s6
  %s9 = scalar_select 0, %s8, %s6
  %v10 = vstv %s4
  %11 = vst [vmem:[#allocation2] sm:$0x1] %v10
  $region1: #{tpu_custom_call.1} parent=0
    #allocation3 [shape = 'u8[1024]{0}', space=vmem, size = 0x400, scoped, tag = 'output window, operand 0']
    #allocation4 [shape = 's32[2]{0}', space=sflag, size = 0x8, scoped, tag = 'scoped memory for tpu_custom_call.1']
    %12 = vsyncpa [#allocation4], 0
    %s13 = scalar_lea.sflag [#allocation4], 1
    %14 = vsyncpa %s13, 0
    loop: start=0, step=1, limit=5
    $region2: #{tpu_custom_call.1} parent=1 // loop_pre_header
      _
    $region3: #{tpu_custom_call.1} parent=1 // loop_header
      %s16 = sphi 0, %s20
      %p17 = scmp.ge.s32.totalorder %s16, 5
      %s26 = sphi 0, %s28
      %s29 = sphi 0, %s26
      %s30 = sphi 0, %s29
      %s46 = sphi 0, %s30
      %s50 = sphi 0, %s50
      %s52 = sphi 0, %s50
      %s53 = sphi 0, %s52
      %s67 = sphi 0, %s53
      %s71 = sphi 0, %s71
      %s73 = sphi 0, %s71
      %s74 = sphi 0, %s73
      %s88 = sphi 0, %s74
      %s92 = sphi 0, %s92
      %s94 = sphi 0, %s92
      %s95 = sphi 0, %s94
      %s109 = sphi 0, %s95
      %s113 = sphi 0, %s113
      %s115 = sphi 0, %s113
      %s116 = sphi 0, %s115
      %s130 = sphi 0, %s116
      %s136 = sphi 0, %s138
      %s139 = sphi 0, %s136
      %s140 = sphi 0, %s139
      %s156 = sphi 0, %s140
    $region4: #{tpu_custom_call.1} parent=1 // loop_header_branch
      %19 = sbr.rel (%p17) target = $region8
    $region5: #{tpu_custom_call.1} parent=1 // loop_body
      %s21 = ssub.s32 %s16, 1
      %s22 = ssub.s32 %s16, 2
      %s23 = sadd.s32 %s16, 1
      %s24 = ssub.s32 %s16, %s23
      %p25 = scmp.eq.s32.totalorder %s24, 0
      %s27 = sadd.s32 %s26, 1
      %s28 = scalar_select %p25, %s26, %s27
      %p31 = pneg %p25
      %p32 = scmp.eq.s32.totalorder %s16, 2
      %p33 = por %p31, %p32
      %p34 = scmp.ne.s32.totalorder %s26, %s29
      %p35 = scmp.eq.s32.totalorder %s16, 0
      %p36 = por %p34, %p35
      %p37 = scmp.ne.s32.totalorder %s26, %s29
      %p38 = scmp.eq.s32.totalorder %s21, 2
      %p39 = por %p37, %p38
      %p40 = scmp.ne.s32.totalorder %s29, %s30
      %p41 = scmp.eq.s32.totalorder %s21, 0
      %p42 = por %p40, %p41
      %p43 = scmp.ne.s32.totalorder %s29, %s30
      %p44 = scmp.eq.s32.totalorder %s22, 2
      %p45 = por %p43, %p44
      %p47 = scmp.ne.s32.totalorder %s30, %s46
      %p48 = scmp.eq.s32.totalorder %s22, 0
      %p49 = por %p47, %p48
      %s51 = sadd.s32 %s50, 1
      %p54 = scmp.eq.s32.totalorder %s16, 2
      %p55 = scmp.ne.s32.totalorder %s50, %s52
      %p56 = scmp.eq.s32.totalorder %s16, 0
      %p57 = por %p55, %p56
      %p58 = scmp.ne.s32.totalorder %s50, %s52
      %p59 = scmp.eq.s32.totalorder %s21, 2
      %p60 = por %p58, %p59
      %p61 = scmp.ne.s32.totalorder %s52, %s53
      %p62 = scmp.eq.s32.totalorder %s21, 0
      %p63 = por %p61, %p62
      %p64 = scmp.ne.s32.totalorder %s52, %s53
      %p65 = scmp.eq.s32.totalorder %s22, 2
      %p66 = por %p64, %p65
      %p68 = scmp.ne.s32.totalorder %s53, %s67
      %p69 = scmp.eq.s32.totalorder %s22, 0
      %p70 = por %p68, %p69
      %s72 = sadd.s32 %s71, 1
      %p75 = scmp.eq.s32.totalorder %s16, 2
      %p76 = scmp.ne.s32.totalorder %s71, %s73
      %p77 = scmp.eq.s32.totalorder %s16, 0
      %p78 = por %p76, %p77
      %p79 = scmp.ne.s32.totalorder %s71, %s73
      %p80 = scmp.eq.s32.totalorder %s21, 2
      %p81 = por %p79, %p80
      %p82 = scmp.ne.s32.totalorder %s73, %s74
      %p83 = scmp.eq.s32.totalorder %s21, 0
      %p84 = por %p82, %p83
      %p85 = scmp.ne.s32.totalorder %s73, %s74
      %p86 = scmp.eq.s32.totalorder %s22, 2
      %p87 = por %p85, %p86
      %p89 = scmp.ne.s32.totalorder %s74, %s88
      %p90 = scmp.eq.s32.totalorder %s22, 0
      %p91 = por %p89, %p90
      %s93 = sadd.s32 %s92, 1
      %p96 = scmp.eq.s32.totalorder %s16, 2
      %p97 = scmp.ne.s32.totalorder %s92, %s94
      %p98 = scmp.eq.s32.totalorder %s16, 0
      %p99 = por %p97, %p98
      %p100 = scmp.ne.s32.totalorder %s92, %s94
      %p101 = scmp.eq.s32.totalorder %s21, 2
      %p102 = por %p100, %p101
      %p103 = scmp.ne.s32.totalorder %s94, %s95
      %p104 = scmp.eq.s32.totalorder %s21, 0
      %p105 = por %p103, %p104
      %p106 = scmp.ne.s32.totalorder %s94, %s95
      %p107 = scmp.eq.s32.totalorder %s22, 2
      %p108 = por %p106, %p107
      %p110 = scmp.ne.s32.totalorder %s95, %s109
      %p111 = scmp.eq.s32.totalorder %s22, 0
      %p112 = por %p110, %p111
      %s114 = sadd.s32 %s113, 1
      %p117 = scmp.eq.s32.totalorder %s16, 2
      %p118 = scmp.ne.s32.totalorder %s113, %s115
      %p119 = scmp.eq.s32.totalorder %s16, 0
      %p120 = por %p118, %p119
      %p121 = scmp.ne.s32.totalorder %s113, %s115
      %p122 = scmp.eq.s32.totalorder %s21, 2
      %p123 = por %p121, %p122
      %p124 = scmp.ne.s32.totalorder %s115, %s116
      %p125 = scmp.eq.s32.totalorder %s21, 0
      %p126 = por %p124, %p125
      %p127 = scmp.ne.s32.totalorder %s115, %s116
      %p128 = scmp.eq.s32.totalorder %s22, 2
      %p129 = por %p127, %p128
      %p131 = scmp.ne.s32.totalorder %s116, %s130
      %p132 = scmp.eq.s32.totalorder %s22, 0
      %p133 = por %p131, %p132
      %s134 = ssub.s32 %s16, %s23
      %p135 = scmp.eq.s32.totalorder %s134, 0
      %s137 = sadd.s32 %s136, 1
      %s138 = scalar_select %p135, %s136, %s137
      %p141 = pneg %p135
      %p142 = scmp.eq.s32.totalorder %s16, 2
      %p143 = por %p141, %p142
      %p144 = scmp.ne.s32.totalorder %s136, %s139
      %p145 = scmp.eq.s32.totalorder %s16, 0
      %p146 = por %p144, %p145
      %p147 = scmp.ne.s32.totalorder %s136, %s139
      %p148 = scmp.eq.s32.totalorder %s21, 2
      %p149 = por %p147, %p148
      %p150 = scmp.ne.s32.totalorder %s139, %s140
      %p151 = scmp.eq.s32.totalorder %s21, 0
      %p152 = por %p150, %p151
      %p153 = scmp.ne.s32.totalorder %s139, %s140
      %p154 = scmp.eq.s32.totalorder %s22, 2
      %p155 = por %p153, %p154
      %p157 = scmp.ne.s32.totalorder %s140, %s156
      %p158 = scmp.eq.s32.totalorder %s22, 0
      %p159 = por %p157, %p158
      %p160 = scmp.le.s32.totalorder 1, %s16
      %p161 = scmp.lt.s32.totalorder %s16, 4
      %p162 = pnand %p160, %p161
      %p163 = pneg %p162
      // Predicated region
      $region9: #{tpu_custom_call.1} parent=5 // pred_check
        _
      $region10: #{tpu_custom_call.1} parent=5 // pred_check_branch
        %165 = sbr.rel (%p162) target = $region12
      $region11: #{tpu_custom_call.1} parent=5 // pred_region
        %s166 = ssub.s32 %s16, 1
        // Predicated region
        $region13: #{tpu_custom_call.1} parent=11 // pred_check
          %p167 = pneg %p63
        $region14: #{tpu_custom_call.1} parent=11 // pred_check_branch
          %169 = sbr.rel (%p167) target = $region16
        $region15: #{tpu_custom_call.1} parent=11 // pred_region
          _
        $region16: #{tpu_custom_call.1} parent=11 // pred_fallthru
          _
        // Predicated region
        $region17: #{tpu_custom_call.1} parent=11 // pred_check
          %p170 = pneg %p84
        $region18: #{tpu_custom_call.1} parent=11 // pred_check_branch
          %172 = sbr.rel (%p170) target = $region20
        $region19: #{tpu_custom_call.1} parent=11 // pred_region
          _
        $region20: #{tpu_custom_call.1} parent=11 // pred_fallthru
          _
        // Predicated region
        $region21: #{tpu_custom_call.1} parent=11 // pred_check
          %p173 = pneg %p105
        $region22: #{tpu_custom_call.1} parent=11 // pred_check_branch
          %175 = sbr.rel (%p173) target = $region24
        $region23: #{tpu_custom_call.1} parent=11 // pred_region
          _
        $region24: #{tpu_custom_call.1} parent=11 // pred_fallthru
          _
        // Predicated region
        $region25: #{tpu_custom_call.1} parent=11 // pred_check
          %p176 = pneg %p126
        $region26: #{tpu_custom_call.1} parent=11 // pred_check_branch
          %178 = sbr.rel (%p176) target = $region28
        $region27: #{tpu_custom_call.1} parent=11 // pred_region
          _
        $region28: #{tpu_custom_call.1} parent=11 // pred_fallthru
          _
      $region12: #{tpu_custom_call.1} parent=5 // pred_fallthru
        _
      %p179 = scmp.lt.s32.totalorder %s16, 3
      // Predicated region
      $region29: #{tpu_custom_call.1} parent=5 // pred_check
        %p180 = pneg %p179
      $region30: #{tpu_custom_call.1} parent=5 // pred_check_branch
        %182 = sbr.rel (%p180) target = $region32
      $region31: #{tpu_custom_call.1} parent=5 // pred_region
        // Predicated region
        $region33: #{tpu_custom_call.1} parent=31 // pred_check
          %p183 = pneg %p36
        $region34: #{tpu_custom_call.1} parent=31 // pred_check_branch
          %185 = sbr.rel (%p183) target = $region36
        $region35: #{tpu_custom_call.1} parent=31 // pred_region
          %p186 = scmp.lt.s32.totalorder %s16, 2
          %s187 = scalar_select %p186, %s16, 2
          %s188 = smul.addr %s187, 8
          %s189 = scalar_lea.vmem %s0, %s188
        $region36: #{tpu_custom_call.1} parent=31 // pred_fallthru
          _
      $region32: #{tpu_custom_call.1} parent=5 // pred_fallthru
        _
      %p190 = scmp.le.s32.totalorder 1, %s16
      %p191 = scmp.lt.s32.totalorder %s16, 4
      %p192 = pnand %p190, %p191
      %p193 = pneg %p192
      // Predicated region
      $region37: #{tpu_custom_call.1} parent=5 // pred_check
        _
      $region38: #{tpu_custom_call.1} parent=5 // pred_check_branch
        %195 = sbr.rel (%p192) target = $region40
      $region39: #{tpu_custom_call.1} parent=5 // pred_region
        %s196 = ssub.s32 %s16, 1
        %p197 = scmp.lt.s32.totalorder %s21, 2
        %s198 = scalar_select %p197, %s21, 2
        %s199 = smul.addr %s198, 8
        %s200 = scalar_lea.vmem %s0, %s199
        %p201 = pneg %p42
        %p202 = pneg %p39
        %p203 = pneg %p63
        %p204 = pneg %p60
        %p205 = pneg %p84
        %p206 = pneg %p81
        %p207 = pneg %p105
        %p208 = pneg %p102
        %p209 = pneg %p126
        %p210 = pneg %p123
        %p211 = pneg %p152
        %p212 = pneg %p149
        %s213 = sand.u32 %s139, 1
        %s214 = scalar_lea.sflag [#allocation4], %s213
        %s215 = sand.u32 %s139, 1
        %s216 = scalar_lea.vmem [#allocation3], %s215
        %p217 = scmp.lt.s32.totalorder %s21, 2
        %s218 = scalar_select %p217, %s21, 2
        %s219 = smul.addr %s218, 8
        %s220 = scalar_lea.vmem %s0, %s219
        %v221 = vld [vmem:[%s220] sm:$0xff]
        %v222 = vld [vmem:[%s1] sm:$0xff]
        %v223 = vld [vmem:[%s1 + $0x8] sm:$0xff]
        %v224 = vld [vmem:[%s3] sm:$0x1]
        %v225 = vld [vmem:[%s2] sm:$0xff]
        %v226 = vld [vmem:[%s2 + $0x8] sm:$0xff]
        %228 = vset.pattern.permute.xlu0 0
        %229 = vperm.xlu0 %228, %v225
        %v230 = vpop.permute.xlu0 %229
        %233 = vset.pattern.permute.xlu0 0
        %234 = vperm.xlu0 %233, %v226
        %v235 = vpop.permute.xlu0 %234
        %238 = vset.pattern.permute.xlu0 0
        %239 = vperm.xlu0 %238, %v222
        %v240 = vpop.permute.xlu0 %239
        %243 = vset.pattern.permute.xlu0 0
        %244 = vperm.xlu0 %243, %v223
        %v245 = vpop.permute.xlu0 %244
        %v247 = vlaneseq
        %v248 = vshrl.u32 %v247, 7
        %v249 = vsub.s32 0, %v248
        %v250 = vrot.slane %v221, %v249
        %v251 = vmul.f32 %v240, %v250
        %v252 = vmul.f32 %v245, %v250
        %v253 = vadd.f32 %v230, %v251
        %v254 = vadd.f32 %v235, %v252
        %255 = vset.pattern.permute.xlu0 1
        %256 = vperm.xlu0 %255, %v222
        %v257 = vpop.permute.xlu0 %256
        %259 = vset.pattern.permute.xlu0 1
        %260 = vperm.xlu0 %259, %v223
        %v261 = vpop.permute.xlu0 %260
        %v263 = vlaneseq
        %v264 = vshrl.u32 %v263, 7
        %v265 = vsub.s32 1, %v264
        %v266 = vrot.slane %v221, %v265
        %v267 = vmul.f32 %v257, %v266
        %v268 = vmul.f32 %v261, %v266
        %v269 = vadd.f32 %v253, %v267
        %v270 = vadd.f32 %v254, %v268
        %271 = vset.pattern.permute.xlu0 2
        %272 = vperm.xlu0 %271, %v222
        %v273 = vpop.permute.xlu0 %272
        %275 = vset.pattern.permute.xlu0 2
        %276 = vperm.xlu0 %275, %v223
        %v277 = vpop.permute.xlu0 %276
        %v279 = vlaneseq
        %v280 = vshrl.u32 %v279, 7
        %v281 = vsub.s32 2, %v280
        %v282 = vrot.slane %v221, %v281
        %v283 = vmul.f32 %v273, %v282
        %v284 = vmul.f32 %v277, %v282
        %v285 = vadd.f32 %v269, %v283
        %v286 = vadd.f32 %v270, %v284
        %287 = vset.pattern.permute.xlu0 3
        %288 = vperm.xlu0 %287, %v222
        %v289 = vpop.permute.xlu0 %288
        %291 = vset.pattern.permute.xlu0 3
        %292 = vperm.xlu0 %291, %v223
        %v293 = vpop.permute.xlu0 %292
        %v295 = vlaneseq
        %v296 = vshrl.u32 %v295, 7
        %v297 = vsub.s32 3, %v296
        %v298 = vrot.slane %v221, %v297
        %v299 = vmul.f32 %v289, %v298
        %v300 = vmul.f32 %v293, %v298
        %v301 = vadd.f32 %v285, %v299
        %v302 = vadd.f32 %v286, %v300
        %303 = vset.pattern.permute.xlu0 4
        %304 = vperm.xlu0 %303, %v222
        %v305 = vpop.permute.xlu0 %304
        %307 = vset.pattern.permute.xlu0 4
        %308 = vperm.xlu0 %307, %v223
        %v309 = vpop.permute.xlu0 %308
        %v311 = vlaneseq
        %v312 = vshrl.u32 %v311, 7
        %v313 = vsub.s32 4, %v312
        %v314 = vrot.slane %v221, %v313
        %v315 = vmul.f32 %v305, %v314
        %v316 = vmul.f32 %v309, %v314
        %v317 = vadd.f32 %v301, %v315
        %v318 = vadd.f32 %v302, %v316
        %319 = vset.pattern.permute.xlu0 5
        %320 = vperm.xlu0 %319, %v222
        %v321 = vpop.permute.xlu0 %320
        %323 = vset.pattern.permute.xlu0 5
        %324 = vperm.xlu0 %323, %v223
        %v325 = vpop.permute.xlu0 %324
        %v327 = vlaneseq
        %v328 = vshrl.u32 %v327, 7
        %v329 = vsub.s32 5, %v328
        %v330 = vrot.slane %v221, %v329
        %v331 = vmul.f32 %v321, %v330
        %v332 = vmul.f32 %v325, %v330
        %v333 = vadd.f32 %v317, %v331
        %v334 = vadd.f32 %v318, %v332
        %335 = vset.pattern.permute.xlu0 6
        %336 = vperm.xlu0 %335, %v222
        %v337 = vpop.permute.xlu0 %336
        %339 = vset.pattern.permute.xlu0 6
        %340 = vperm.xlu0 %339, %v223
        %v341 = vpop.permute.xlu0 %340
        %v343 = vlaneseq
        %v344 = vshrl.u32 %v343, 7
        %v345 = vsub.s32 6, %v344
        %v346 = vrot.slane %v221, %v345
        %v347 = vmul.f32 %v337, %v346
        %v348 = vmul.f32 %v341, %v346
        %v349 = vadd.f32 %v333, %v347
        %v350 = vadd.f32 %v334, %v348
        %351 = vset.pattern.permute.xlu0 7
        %352 = vperm.xlu0 %351, %v222
        %v353 = vpop.permute.xlu0 %352
        %355 = vset.pattern.permute.xlu0 7
        %356 = vperm.xlu0 %355, %v223
        %v357 = vpop.permute.xlu0 %356
        %v359 = vlaneseq
        %v360 = vshrl.u32 %v359, 7
        %v361 = vsub.s32 7, %v360
        %v362 = vrot.slane %v221, %v361
        %v363 = vmul.f32 %v353, %v362
        %v364 = vmul.f32 %v357, %v362
        %v365 = vadd.f32 %v349, %v363
        %v366 = vadd.f32 %v350, %v364
        %v367 = vmax.f32 %v365, 0.0
        %v368 = vmax.f32 %v366, 0.0
        %v369 = vld [vmem:[#allocation2] sm:$0x1]
        %371 = vset.pattern.permute.xlu0 0
        %372 = vperm.xlu0 %371, %v369
        %v373 = vpop.permute.xlu0 %372
        %v375 = vlaneseq
        %v376 = vshrl.u32 %v375, 7
        %v377 = vsub.s32 0, %v376
        %v378 = vrot.slane %v373, %v377
        %380 = vset.pattern.permute.xlu0 0
        %381 = vperm.xlu0 %380, %v224
        %v382 = vpop.permute.xlu0 %381
        %v384 = vlaneseq
        %v385 = vshrl.u32 %v384, 7
        %v386 = vsub.s32 0, %v385
        %v387 = vrot.slane %v382, %v386
        %v388 = vmul.f32 %v387, %v367
        %v389 = vadd.f32 %v378, %v388
        %390 = vset.pattern.permute.xlu0 1
        %391 = vperm.xlu0 %390, %v224
        %v392 = vpop.permute.xlu0 %391
        %v394 = vlaneseq
        %v395 = vshrl.u32 %v394, 7
        %v396 = vsub.s32 0, %v395
        %v397 = vrot.slane %v392, %v396
        %v398 = vmul.f32 %v397, %v367
        %v400 = vrot.slane %v398, 1
        %v402 = vadd.f32 %v389, %v400
        %403 = vset.pattern.permute.xlu0 2
        %404 = vperm.xlu0 %403, %v224
        %v405 = vpop.permute.xlu0 %404
        %v407 = vlaneseq
        %v408 = vshrl.u32 %v407, 7
        %v409 = vsub.s32 0, %v408
        %v410 = vrot.slane %v405, %v409
        %v411 = vmul.f32 %v410, %v367
        %v413 = vrot.slane %v411, 2
        %v415 = vadd.f32 %v402, %v413
        %416 = vset.pattern.permute.xlu0 3
        %417 = vperm.xlu0 %416, %v224
        %v418 = vpop.permute.xlu0 %417
        %v420 = vlaneseq
        %v421 = vshrl.u32 %v420, 7
        %v422 = vsub.s32 0, %v421
        %v423 = vrot.slane %v418, %v422
        %v424 = vmul.f32 %v423, %v367
        %v426 = vrot.slane %v424, 3
        %v428 = vadd.f32 %v415, %v426
        %429 = vset.pattern.permute.xlu0 4
        %430 = vperm.xlu0 %429, %v224
        %v431 = vpop.permute.xlu0 %430
        %v433 = vlaneseq
        %v434 = vshrl.u32 %v433, 7
        %v435 = vsub.s32 0, %v434
        %v436 = vrot.slane %v431, %v435
        %v437 = vmul.f32 %v436, %v367
        %v439 = vrot.slane %v437, 4
        %v441 = vadd.f32 %v428, %v439
        %442 = vset.pattern.permute.xlu0 5
        %443 = vperm.xlu0 %442, %v224
        %v444 = vpop.permute.xlu0 %443
        %v446 = vlaneseq
        %v447 = vshrl.u32 %v446, 7
        %v448 = vsub.s32 0, %v447
        %v449 = vrot.slane %v444, %v448
        %v450 = vmul.f32 %v449, %v367
        %v452 = vrot.slane %v450, 5
        %v454 = vadd.f32 %v441, %v452
        %455 = vset.pattern.permute.xlu0 6
        %456 = vperm.xlu0 %455, %v224
        %v457 = vpop.permute.xlu0 %456
        %v459 = vlaneseq
        %v460 = vshrl.u32 %v459, 7
        %v461 = vsub.s32 0, %v460
        %v462 = vrot.slane %v457, %v461
        %v463 = vmul.f32 %v462, %v367
        %v465 = vrot.slane %v463, 6
        %v467 = vadd.f32 %v454, %v465
        %468 = vset.pattern.permute.xlu0 7
        %469 = vperm.xlu0 %468, %v224
        %v470 = vpop.permute.xlu0 %469
        %v472 = vlaneseq
        %v473 = vshrl.u32 %v472, 7
        %v474 = vsub.s32 0, %v473
        %v475 = vrot.slane %v470, %v474
        %v476 = vmul.f32 %v475, %v367
        %v478 = vrot.slane %v476, 7
        %v480 = vadd.f32 %v467, %v478
        %481 = vset.pattern.permute.xlu0 8
        %482 = vperm.xlu0 %481, %v224
        %v483 = vpop.permute.xlu0 %482
        %v485 = vlaneseq
        %v486 = vshrl.u32 %v485, 7
        %v487 = vsub.s32 0, %v486
        %v488 = vrot.slane %v483, %v487
        %v489 = vmul.f32 %v488, %v368
        %v490 = vadd.f32 %v480, %v489
        %491 = vset.pattern.permute.xlu0 9
        %492 = vperm.xlu0 %491, %v224
        %v493 = vpop.permute.xlu0 %492
        %v495 = vlaneseq
        %v496 = vshrl.u32 %v495, 7
        %v497 = vsub.s32 0, %v496
        %v498 = vrot.slane %v493, %v497
        %v499 = vmul.f32 %v498, %v368
        %v501 = vrot.slane %v499, 1
        %v503 = vadd.f32 %v490, %v501
        %504 = vset.pattern.permute.xlu0 10
        %505 = vperm.xlu0 %504, %v224
        %v506 = vpop.permute.xlu0 %505
        %v508 = vlaneseq
        %v509 = vshrl.u32 %v508, 7
        %v510 = vsub.s32 0, %v509
        %v511 = vrot.slane %v506, %v510
        %v512 = vmul.f32 %v511, %v368
        %v514 = vrot.slane %v512, 2
        %v516 = vadd.f32 %v503, %v514
        %517 = vset.pattern.permute.xlu0 11
        %518 = vperm.xlu0 %517, %v224
        %v519 = vpop.permute.xlu0 %518
        %v521 = vlaneseq
        %v522 = vshrl.u32 %v521, 7
        %v523 = vsub.s32 0, %v522
        %v524 = vrot.slane %v519, %v523
        %v525 = vmul.f32 %v524, %v368
        %v527 = vrot.slane %v525, 3
        %v529 = vadd.f32 %v516, %v527
        %530 = vset.pattern.permute.xlu0 12
        %531 = vperm.xlu0 %530, %v224
        %v532 = vpop.permute.xlu0 %531
        %v534 = vlaneseq
        %v535 = vshrl.u32 %v534, 7
        %v536 = vsub.s32 0, %v535
        %v537 = vrot.slane %v532, %v536
        %v538 = vmul.f32 %v537, %v368
        %v540 = vrot.slane %v538, 4
        %v542 = vadd.f32 %v529, %v540
        %543 = vset.pattern.permute.xlu0 13
        %544 = vperm.xlu0 %543, %v224
        %v545 = vpop.permute.xlu0 %544
        %v547 = vlaneseq
        %v548 = vshrl.u32 %v547, 7
        %v549 = vsub.s32 0, %v548
        %v550 = vrot.slane %v545, %v549
        %v551 = vmul.f32 %v550, %v368
        %v553 = vrot.slane %v551, 5
        %v555 = vadd.f32 %v542, %v553
        %556 = vset.pattern.permute.xlu0 14
        %557 = vperm.xlu0 %556, %v224
        %v558 = vpop.permute.xlu0 %557
        %v560 = vlaneseq
        %v561 = vshrl.u32 %v560, 7
        %v562 = vsub.s32 0, %v561
        %v563 = vrot.slane %v558, %v562
        %v564 = vmul.f32 %v563, %v368
        %v566 = vrot.slane %v564, 6
        %v568 = vadd.f32 %v555, %v566
        %569 = vset.pattern.permute.xlu0 15
        %570 = vperm.xlu0 %569, %v224
        %v571 = vpop.permute.xlu0 %570
        %v573 = vlaneseq
        %v574 = vshrl.u32 %v573, 7
        %v575 = vsub.s32 0, %v574
        %v576 = vrot.slane %v571, %v575
        %v577 = vmul.f32 %v576, %v368
        %v579 = vrot.slane %v577, 7
        %v581 = vadd.f32 %v568, %v579
        %582 = vst [vmem:[%s216] sm:$0x1] %v581
        %s583 = sand.u32 %s139, 1
        %s584 = scalar_lea.sflag [#allocation4], %s583
        %s585 = sand.u32 %s139, 1
        %s586 = scalar_lea.vmem [#allocation3], %s585
        // Predicated region
        $region41: #{tpu_custom_call.1} parent=39 // pred_check
          %p587 = pneg %p149
        $region42: #{tpu_custom_call.1} parent=39 // pred_check_branch
          %589 = sbr.rel (%p587) target = $region44
        $region43: #{tpu_custom_call.1} parent=39 // pred_region
          %s591 = ssub.s32 16, 16
          %592 = vsyncadd %s584, %s591
          %s593 = smul.addr %s21, 16
          %s594 = scalar_lea.hbm %s5, %s593
          %s596 = sshll.u32 %s586, 4
          %s597 = int_to_ptr.vmem [resolvable:$true] %s596
          %599 = dma.vmem_to_hbm [thread:$0]  %s597, 16, %s594, %s584
        $region44: #{tpu_custom_call.1} parent=39 // pred_fallthru
          _
      $region40: #{tpu_custom_call.1} parent=5 // pred_fallthru
        _
      %p600 = scmp.le.s32.totalorder 2, %s16
      // Predicated region
      $region45: #{tpu_custom_call.1} parent=5 // pred_check
        %p601 = pneg %p600
      $region46: #{tpu_custom_call.1} parent=5 // pred_check_branch
        %603 = sbr.rel (%p601) target = $region48
      $region47: #{tpu_custom_call.1} parent=5 // pred_region
        %s604 = ssub.s32 %s16, 2
        // Predicated region
        $region49: #{tpu_custom_call.1} parent=47 // pred_check
          %p605 = pneg %p155
        $region50: #{tpu_custom_call.1} parent=47 // pred_check_branch
          %607 = sbr.rel (%p605) target = $region52
        $region51: #{tpu_custom_call.1} parent=47 // pred_region
          %s608 = sand.u32 %s140, 1
          %s609 = scalar_lea.sflag [#allocation4], %s608
          %s610 = sand.u32 %s140, 1
          %s611 = scalar_lea.vmem [#allocation3], %s610
          %612 = dma.done %s609, 16
        $region52: #{tpu_custom_call.1} parent=47 // pred_fallthru
          _
      $region48: #{tpu_custom_call.1} parent=5 // pred_fallthru
        _
    $region6: #{tpu_custom_call.1} parent=1 // loop_footer
      %s20 = sadd.s32 1, %s16
    $region7: #{tpu_custom_call.1} parent=1 // loop_footer_branch
      %15 = sbr.rel target = $region3
    $region8: #{tpu_custom_call.1} parent=1 // loop_exit
      _
    %613 = vsyncpa [#allocation4], 1
    %s614 = scalar_lea.sflag [#allocation4], 1
    %615 = vsyncpa %s614, 1

</llo_original>
